<compile_context>
chip_gen: v7x
topology: tpu7x:2x2x1
jax: 0.10.0
libtpu: 0.0.40
codegen_flags: <defaults>
</compile_context>

<pallas_src>
import jax
import jax.numpy as jnp
import numpy as np
from jax.experimental import pallas as pl
from jax.experimental.pallas import tpu as pltpu

_LANE = 128


def _round_up(x, m):
    return ((x + m - 1) // m) * m


# ----------------------------------------------------------------------------
# Fused kernel, grid over the broadcast-batch axis `a` (parallel):
#   dinv[b, i]   = rsqrt(colsum_i(adjs[b] + I) + 1e-6)
#   sb[b, i]     = (adjs[b, i, i] + 1) * dinv[b, i]
#   scale_ab[i]  = sb[b, i] * dinv[a, i]        (diagonal of adjs_norm[a, b])
#   xw[b]        = features[b] @ W1^T           (padded to 128 lanes)
#   h1[b]        = relu(scale_ab * xw[b] + b1)
#   out[a]       = mean_b( scale_ab * (h1[b] @ W2^T) ) + b2
# ----------------------------------------------------------------------------
def _fused_dense_gcn_kernel(adj_ref, feat_ref, w1t_ref, w2t_ref, b1_ref,
                            b2_ref, out_ref):
    nb, n, _ = adj_ref.shape
    f_in = feat_ref.shape[-1]
    hp = w1t_ref.shape[-1]
    cp = w2t_ref.shape[-1]
    a_idx = pl.program_id(0)

    adj = adj_ref[...]                                          # (B, N, N)

    row = jax.lax.broadcasted_iota(jnp.int32, (n, n), 0)
    col = jax.lax.broadcasted_iota(jnp.int32, (n, n), 1)
    eye = (row == col).astype(jnp.float32)                      # (N, N)

    # torch .sum(dim=1) == column sums of (A_b + I); +1.0 is the identity.
    deg_row = jnp.sum(adj, axis=1, keepdims=True) + 1.0         # (B, 1, N), lanes
    # move per-node degree from lanes to sublanes (diag-mask + lane reduce,
    # avoids an explicit XLU transpose)
    deg_col = jnp.sum(eye[None, :, :] * deg_row, axis=2,
                      keepdims=True)                            # (B, N, 1)
    dinv = jax.lax.rsqrt(deg_col + 1e-6)                        # EUP, free slot

    diag_col = jnp.sum(adj * eye[None, :, :], axis=2,
                       keepdims=True) + 1.0                     # (A_b+I)[i,i]
    sb = diag_col * dinv                                        # (B, N, 1)

    # select dinv[a] with a VPU mask-reduce (no dynamic slice needed)
    b_iota = jax.lax.broadcasted_iota(jnp.int32, (nb, n, 1), 0)
    dinv_a = jnp.sum(jnp.where(b_iota == a_idx, dinv, 0.0),
                     axis=0, keepdims=True)                     # (1, N, 1)

    scale = sb * dinv_a                                         # (B, N, 1)

    # layer 1: one batched lane-dense MXU matmul + diagonal scale + bias + ReLU
    xw = jnp.dot(feat_ref[...].reshape(nb * n, f_in), w1t_ref[...],
                 preferred_element_type=jnp.float32).reshape(nb, n, hp)
    h1 = jnp.maximum(scale * xw + b1_ref[...], 0.0)             # (B, N, HP)

    # layer 2: one batched lane-dense MXU matmul over all (b, node) rows
    y = jnp.dot(h1.reshape(nb * n, hp), w2t_ref[...],
                preferred_element_type=jnp.float32).reshape(nb, n, cp)

    # diagonal scale again, mean over the broadcast-batch axis b, add bias
    out_ref[...] = jnp.mean(scale * y, axis=0) + b2_ref[...]    # (N, CP)


def fused_dense_gcn(adjs, features, w1t_pad, w2t_pad, b1p, b2p):
    b, n, _ = adjs.shape
    f_in = features.shape[-1]
    hp = w1t_pad.shape[-1]
    cp = w2t_pad.shape[-1]
    return pl.pallas_call(
        _fused_dense_gcn_kernel,
        out_shape=jax.ShapeDtypeStruct((b, n, cp), jnp.float32),
        grid=(b,),
        in_specs=[
            pl.BlockSpec((b, n, n), lambda a: (0, 0, 0)),       # adjs (all b)
            pl.BlockSpec((b, n, f_in), lambda a: (0, 0, 0)),    # features
            pl.BlockSpec((f_in, hp), lambda a: (0, 0)),         # W1^T (padded)
            pl.BlockSpec((hp, cp), lambda a: (0, 0)),           # W2^T (padded)
            pl.BlockSpec((1, hp), lambda a: (0, 0)),            # b1   (padded)
            pl.BlockSpec((1, cp), lambda a: (0, 0)),            # b2   (padded)
        ],
        out_specs=pl.BlockSpec((None, n, cp), lambda a: (a, 0, 0)),
        compiler_params=pltpu.CompilerParams(
            dimension_semantics=("parallel",)),
    )(adjs, features, w1t_pad, w2t_pad, b1p, b2p)


# ----------------------------------------------------------------------------
# Forward wrapper (padding of weight / bias lanes is layout plumbing only)
# ----------------------------------------------------------------------------
@jax.jit
def dense_gcn_forward(adjs, features, w1, b1, w2, b2):
    adjs = adjs.astype(jnp.float32)
    features = features.astype(jnp.float32)

    h_feats, in_feats = w1.shape
    num_classes = w2.shape[0]
    hp = _round_up(h_feats, _LANE)
    cp = _round_up(num_classes, _LANE)

    w1t_pad = jnp.zeros((in_feats, hp), jnp.float32).at[:, :h_feats].set(
        jnp.transpose(w1).astype(jnp.float32))
    b1p = jnp.zeros((1, hp), jnp.float32).at[0, :h_feats].set(
        b1.astype(jnp.float32))
    w2t_pad = jnp.zeros((hp, cp), jnp.float32).at[:h_feats, :num_classes].set(
        jnp.transpose(w2).astype(jnp.float32))
    b2p = jnp.zeros((1, cp), jnp.float32).at[0, :num_classes].set(
        b2.astype(jnp.float32))

    out_pad = fused_dense_gcn(adjs, features, w1t_pad, w2t_pad, b1p, b2p)
    return out_pad[:, :, :num_classes]


# ----------------------------------------------------------------------------
# Pure-JAX reference (literal transcription of the PyTorch forward)
# ----------------------------------------------------------------------------
def dense_gcn_reference(adjs, features, w1, b1, w2, b2):
    b, n, _ = adjs.shape
    eye = jnp.eye(n, dtype=jnp.float32)
    a = adjs + eye
    deg = a.sum(axis=1)                                   # (B, N), torch sum(dim=1)
    dinv = 1.0 / jnp.sqrt(deg + 1e-6)
    d = jax.vmap(jnp.diag)(dinv)                          # diag_embed -> (B, N, N)
    adjs2 = a[None, :, :, :] * d[:, None, :, :]           # * D.unsqueeze(1) -> (B,B,N,N)
    adjs_norm = adjs2 * d[None, :, :, :]                  # * D.unsqueeze(0)
    dense1 = jnp.einsum('abij,bjf->abif', adjs_norm, features)
    h = jnp.maximum(dense1 @ w1.T + b1, 0.0)
    dense2 = jnp.einsum('abij,abjh->abih', adjs_norm, h)
    out = dense2 @ w2.T + b2
    return out.mean(axis=1)


# ----------------------------------------------------------------------------
# Main
# ----------------------------------------------------------------------------
if __name__ == "__main__":
    B, N = 2, 8            # batch of graphs, max_nodes
    IN_FEATS, H_FEATS, NUM_CLASSES = 4, 16, 3

    key = jax.random.PRNGKey(0)
    k_adj, k_feat, k_w1, k_b1, k_w2, k_b2 = jax.random.split(key, 6)

    # symmetric 0/1 adjacency, zero diagonal
    raw = (jax.random.uniform(k_adj, (B, N, N)) > 0.6).astype(jnp.float32)
    adjs = jnp.clip(raw + jnp.swapaxes(raw, 1, 2), 0.0, 1.0)
    adjs = adjs * (1.0 - jnp.eye(N, dtype=jnp.float32))

    features = jax.random.normal(k_feat, (B, N, IN_FEATS), dtype=jnp.float32)

    # Deterministic parameter init (nn.Linear shapes: W [out, in], b [out])
    w1 = jax.random.normal(k_w1, (H_FEATS, IN_FEATS), dtype=jnp.float32) * 0.1
    b1 = jax.random.normal(k_b1, (H_FEATS,), dtype=jnp.float32) * 0.1
    w2 = jax.random.normal(k_w2, (NUM_CLASSES, H_FEATS), dtype=jnp.float32) * 0.1
    b2 = jax.random.normal(k_b2, (NUM_CLASSES,), dtype=jnp.float32) * 0.1

    out = dense_gcn_forward(adjs, features, w1, b1, w2, b2)
    out = jax.block_until_ready(out)

    ref = dense_gcn_reference(adjs, features, w1, b1, w2, b2)
    np.testing.assert_allclose(np.asarray(out), np.asarray(ref),
                               rtol=1e-4, atol=1e-5)

    print("KERNEL_OK")
</pallas_src>

<mosaic_0001>
module attributes {stable_mosaic.version = 11 : i64} {
  func.func @_fused_dense_gcn_kernel(%arg0: i32, %arg1: memref<2x8x8xf32, #tpu.memory_space<vmem>>, %arg2: memref<2x8x4xf32, #tpu.memory_space<vmem>>, %arg3: memref<4x128xf32, #tpu.memory_space<vmem>>, %arg4: memref<128x128xf32, #tpu.memory_space<vmem>>, %arg5: memref<1x128xf32, #tpu.memory_space<vmem>>, %arg6: memref<1x128xf32, #tpu.memory_space<vmem>>, %arg7: memref<1x8x128xf32, #tpu.memory_space<vmem>>) attributes {dimension_semantics = [#tpu.dimension_semantics<parallel>], iteration_bounds = array<i64: 2>, scalar_prefetch = 0 : i64, scratch_operands = 0 : i64, tpu.core_type = #tpu.core_type<tc>, window_params = [{pipeline_mode = #tpu.pipeline_mode<synchronous>, transform_indices = @transform_0, window_bounds = array<i64: 2, 8, 8>}, {pipeline_mode = #tpu.pipeline_mode<synchronous>, transform_indices = @transform_1, window_bounds = array<i64: 2, 8, 4>}, {pipeline_mode = #tpu.pipeline_mode<synchronous>, transform_indices = @transform_2, window_bounds = array<i64: 4, 128>}, {pipeline_mode = #tpu.pipeline_mode<synchronous>, transform_indices = @transform_3, window_bounds = array<i64: 128, 128>}, {pipeline_mode = #tpu.pipeline_mode<synchronous>, transform_indices = @transform_4, window_bounds = array<i64: 1, 128>}, {pipeline_mode = #tpu.pipeline_mode<synchronous>, transform_indices = @transform_5, window_bounds = array<i64: 1, 128>}, {transform_indices = @transform_6, window_bounds = array<i64: 1, 8, 128>}]} {
    %c0 = arith.constant 0 : index
    %c0_0 = arith.constant 0 : index
    %c0_1 = arith.constant 0 : index
    %0 = vector.load %arg1[%c0, %c0_0, %c0_1] : memref<2x8x8xf32, #tpu.memory_space<vmem>>, vector<2x8x8xf32>
    %1 = tpu.iota {dimensions = array<i32: 0>} : vector<8x8xi32>
    %2 = tpu.iota {dimensions = array<i32: 1>} : vector<8x8xi32>
    %3 = arith.cmpi eq, %1, %2 : vector<8x8xi32>
    %4 = arith.extui %3 : vector<8x8xi1> to vector<8x8xi32>
    %5 = arith.sitofp %4 : vector<8x8xi32> to vector<8x8xf32>
    %cst = arith.constant dense<0.000000e+00> : vector<2x8xf32>
    %6 = vector.multi_reduction <add>, %0, %cst [1] : vector<2x8x8xf32> to vector<2x8xf32>
    %7 = vector.shape_cast %6 : vector<2x8xf32> to vector<2x1x8xf32>
    %cst_2 = arith.constant 1.000000e+00 : f32
    %8 = vector.broadcast %cst_2 : f32 to vector<2x1x8xf32>
    %9 = arith.addf %7, %8 : vector<2x1x8xf32>
    %10 = vector.shape_cast %5 : vector<8x8xf32> to vector<1x8x8xf32>
    %11 = vector.broadcast %10 : vector<1x8x8xf32> to vector<2x8x8xf32>
    %12 = vector.broadcast %9 : vector<2x1x8xf32> to vector<2x8x8xf32>
    %13 = arith.mulf %11, %12 : vector<2x8x8xf32>
    %cst_3 = arith.constant dense<0.000000e+00> : vector<2x8xf32>
    %14 = vector.multi_reduction <add>, %13, %cst_3 [2] : vector<2x8x8xf32> to vector<2x8xf32>
    %15 = vector.shape_cast %14 : vector<2x8xf32> to vector<2x8x1xf32>
    %cst_4 = arith.constant 9.99999997E-7 : f32
    %16 = vector.broadcast %cst_4 : f32 to vector<2x8x1xf32>
    %17 = arith.addf %15, %16 : vector<2x8x1xf32>
    %18 = math.rsqrt %17 : vector<2x8x1xf32>
    %19 = vector.shape_cast %5 : vector<8x8xf32> to vector<1x8x8xf32>
    %20 = vector.broadcast %19 : vector<1x8x8xf32> to vector<2x8x8xf32>
    %21 = arith.mulf %0, %20 : vector<2x8x8xf32>
    %cst_5 = arith.constant dense<0.000000e+00> : vector<2x8xf32>
    %22 = vector.multi_reduction <add>, %21, %cst_5 [2] : vector<2x8x8xf32> to vector<2x8xf32>
    %23 = vector.shape_cast %22 : vector<2x8xf32> to vector<2x8x1xf32>
    %cst_6 = arith.constant 1.000000e+00 : f32
    %24 = vector.broadcast %cst_6 : f32 to vector<2x8x1xf32>
    %25 = arith.addf %23, %24 : vector<2x8x1xf32>
    %26 = arith.mulf %25, %18 : vector<2x8x1xf32>
    %27 = tpu.iota {dimensions = array<i32: 0>} : vector<2x8x1xi32>
    %28 = vector.broadcast %arg0 : i32 to vector<2x8x1xi32>
    %29 = arith.cmpi eq, %27, %28 : vector<2x8x1xi32>
    %cst_7 = arith.constant 0.000000e+00 : f32
    %30 = vector.broadcast %cst_7 : f32 to vector<2x8x1xf32>
    %31 = arith.select %29, %18, %30 : vector<2x8x1xi1>, vector<2x8x1xf32>
    %cst_8 = arith.constant dense<0.000000e+00> : vector<8x1xf32>
    %32 = vector.multi_reduction <add>, %31, %cst_8 [0] : vector<2x8x1xf32> to vector<8x1xf32>
    %33 = vector.shape_cast %32 : vector<8x1xf32> to vector<1x8x1xf32>
    %34 = vector.broadcast %33 : vector<1x8x1xf32> to vector<2x8x1xf32>
    %35 = arith.mulf %26, %34 : vector<2x8x1xf32>
    %c0_9 = arith.constant 0 : index
    %c0_10 = arith.constant 0 : index
    %c0_11 = arith.constant 0 : index
    %36 = vector.load %arg2[%c0_9, %c0_10, %c0_11] : memref<2x8x4xf32, #tpu.memory_space<vmem>>, vector<2x8x4xf32>
    %37 = vector.shape_cast %36 : vector<2x8x4xf32> to vector<16x4xf32>
    %c0_12 = arith.constant 0 : index
    %c0_13 = arith.constant 0 : index
    %38 = vector.load %arg3[%c0_12, %c0_13] : memref<4x128xf32, #tpu.memory_space<vmem>>, vector<4x128xf32>
    %cst_14 = arith.constant dense<0.000000e+00> : vector<16x128xf32>
    %39 = tpu.matmul %37, %38, %cst_14 {dimension_numbers = #tpu.dot_dimension_numbers<[1], [0], [0], [1], [0, 0, 1, 1], [], []>} : vector<16x4xf32>, vector<4x128xf32>, vector<16x128xf32> -> vector<16x128xf32>
    %40 = vector.shape_cast %39 : vector<16x128xf32> to vector<2x8x128xf32>
    %41 = vector.broadcast %35 : vector<2x8x1xf32> to vector<2x8x128xf32>
    %42 = arith.mulf %41, %40 : vector<2x8x128xf32>
    %c0_15 = arith.constant 0 : index
    %c0_16 = arith.constant 0 : index
    %43 = vector.load %arg5[%c0_15, %c0_16] : memref<1x128xf32, #tpu.memory_space<vmem>>, vector<1x128xf32>
    %44 = vector.shape_cast %43 : vector<1x128xf32> to vector<1x1x128xf32>
    %45 = vector.broadcast %44 : vector<1x1x128xf32> to vector<2x8x128xf32>
    %46 = arith.addf %42, %45 : vector<2x8x128xf32>
    %cst_17 = arith.constant 0.000000e+00 : f32
    %47 = vector.broadcast %cst_17 : f32 to vector<2x8x128xf32>
    %48 = arith.maximumf %46, %47 : vector<2x8x128xf32>
    %49 = vector.shape_cast %48 : vector<2x8x128xf32> to vector<16x128xf32>
    %c0_18 = arith.constant 0 : index
    %c0_19 = arith.constant 0 : index
    %50 = vector.load %arg4[%c0_18, %c0_19] : memref<128x128xf32, #tpu.memory_space<vmem>>, vector<128x128xf32>
    %cst_20 = arith.constant dense<0.000000e+00> : vector<16x128xf32>
    %51 = tpu.matmul %49, %50, %cst_20 {dimension_numbers = #tpu.dot_dimension_numbers<[1], [0], [0], [1], [0, 0, 1, 1], [], []>} : vector<16x128xf32>, vector<128x128xf32>, vector<16x128xf32> -> vector<16x128xf32>
    %52 = vector.shape_cast %51 : vector<16x128xf32> to vector<2x8x128xf32>
    %53 = vector.broadcast %35 : vector<2x8x1xf32> to vector<2x8x128xf32>
    %54 = arith.mulf %53, %52 : vector<2x8x128xf32>
    %cst_21 = arith.constant dense<0.000000e+00> : vector<8x128xf32>
    %55 = vector.multi_reduction <add>, %54, %cst_21 [0] : vector<2x8x128xf32> to vector<8x128xf32>
    %cst_22 = arith.constant 2.000000e+00 : f32
    %56 = vector.broadcast %cst_22 : f32 to vector<8x128xf32>
    %57 = arith.divf %55, %56 : vector<8x128xf32>
    %c0_23 = arith.constant 0 : index
    %c0_24 = arith.constant 0 : index
    %58 = vector.load %arg6[%c0_23, %c0_24] : memref<1x128xf32, #tpu.memory_space<vmem>>, vector<1x128xf32>
    %59 = vector.broadcast %58 : vector<1x128xf32> to vector<8x128xf32>
    %60 = arith.addf %57, %59 : vector<8x128xf32>
    %c0_25 = arith.constant 0 : index
    %c0_26 = arith.constant 0 : index
    %c0_27 = arith.constant 0 : index
    %61 = vector.load %arg7[%c0_25, %c0_26, %c0_27] : memref<1x8x128xf32, #tpu.memory_space<vmem>>, vector<1x8x128xf32>
    %62 = vector.shape_cast %61 : vector<1x8x128xf32> to vector<8x128xf32>
    %63 = vector.shape_cast %60 : vector<8x128xf32> to vector<1x8x128xf32>
    tpu.vector_store %arg7[%c0_25, %c0_26, %c0_27], %63 {strides = array<i32>} : memref<1x8x128xf32, #tpu.memory_space<vmem>>, vector<1x8x128xf32>,
    return
  }
  func.func @transform_0(%arg0: i32) -> (i32, i32, i32) {
    %c0_i32 = arith.constant 0 : i32
    %c0_i32_0 = arith.constant 0 : i32
    %c0_i32_1 = arith.constant 0 : i32
    %c0_i32_2 = arith.constant 0 : i32
    return %c0_i32, %c0_i32_0, %c0_i32_1 : i32, i32, i32
  }
  func.func @transform_1(%arg0: i32) -> (i32, i32, i32) {
    %c0_i32 = arith.constant 0 : i32
    %c0_i32_0 = arith.constant 0 : i32
    %c0_i32_1 = arith.constant 0 : i32
    %c0_i32_2 = arith.constant 0 : i32
    return %c0_i32, %c0_i32_0, %c0_i32_1 : i32, i32, i32
  }
  func.func @transform_2(%arg0: i32) -> (i32, i32) {
    %c0_i32 = arith.constant 0 : i32
    %c0_i32_0 = arith.constant 0 : i32
    %c0_i32_1 = arith.constant 0 : i32
    return %c0_i32, %c0_i32_0 : i32, i32
  }
  func.func @transform_3(%arg0: i32) -> (i32, i32) {
    %c0_i32 = arith.constant 0 : i32
    %c0_i32_0 = arith.constant 0 : i32
    %c0_i32_1 = arith.constant 0 : i32
    return %c0_i32, %c0_i32_0 : i32, i32
  }
  func.func @transform_4(%arg0: i32) -> (i32, i32) {
    %c0_i32 = arith.constant 0 : i32
    %c0_i32_0 = arith.constant 0 : i32
    %c0_i32_1 = arith.constant 0 : i32
    return %c0_i32, %c0_i32_0 : i32, i32
  }
  func.func @transform_5(%arg0: i32) -> (i32, i32) {
    %c0_i32 = arith.constant 0 : i32
    %c0_i32_0 = arith.constant 0 : i32
    %c0_i32_1 = arith.constant 0 : i32
    return %c0_i32, %c0_i32_0 : i32, i32
  }
  func.func @transform_6(%arg0: i32) -> (i32, i32, i32) {
    %c0_i32 = arith.constant 0 : i32
    %c0_i32_0 = arith.constant 0 : i32
    %c0_i32_1 = arith.constant 0 : i32
    return %arg0, %c0_i32, %c0_i32_0 : i32, i32, i32
  }
}

</mosaic_0001>

<llo_original>
// kernel: dense_gcn_forward.1
$region0: #{dense_gcn_forward.1}
  #allocation0 [shape = 'u32[]', space=smem, size = 0x4, offset = 0x4, fixed_abs, tag = 'smem constant byte address 0x4 - core index']
  #allocation1 [shape = 'u32[144,128]{1,0:T(1,128)}', space=vmem, size = 0x12000, scoped, tag = 'internal scratch']
  %s0 = inlined_call_operand.vmem [shape: f32[2,8,8], index: 0, kind: input, shape index: {}]
  %s1 = inlined_call_operand.vmem [shape: f32[2,8,4], index: 1, kind: input, shape index: {}]
  %s2 = inlined_call_operand.vmem [shape: f32[4,128], index: 2, kind: input, shape index: {}]
  %s3 = inlined_call_operand.vmem [shape: f32[128,128], index: 3, kind: input, shape index: {}]
  %s4 = inlined_call_operand.vmem [shape: f32[1,128], index: 4, kind: input, shape index: {}]
  %s5 = inlined_call_operand.vmem [shape: f32[1,128], index: 5, kind: input, shape index: {}]
  %s6 = inlined_call_operand.vmem [shape: f32[2,8,128], index: 6, kind: output, shape index: {}]
  %s7 = sld [smem:[#allocation0]]
  $region57: #{dense_gcn_forward.1} parent=0
    _
  %s9 = ssub.s32 1, %s7
  %s10 = scalar_select 0, %s9, %s7
  loop: start=0, step=1, limit=4
  $region2: #{dense_gcn_forward.1} parent=0 // loop_pre_header
    _
  $region3: #{dense_gcn_forward.1} parent=0 // loop_header
    %s12 = sphi 0, %s16
    %p13 = scmp.ge.s32.totalorder %s12, 4
    %s20 = sphi 0, %s20
    %s22 = sphi 0, %s20
    %s23 = sphi 0, %s22
    %s37 = sphi 0, %s23
    %s41 = sphi 0, %s41
    %s43 = sphi 0, %s41
    %s44 = sphi 0, %s43
    %s58 = sphi 0, %s44
    %s62 = sphi 0, %s62
    %s64 = sphi 0, %s62
    %s65 = sphi 0, %s64
    %s79 = sphi 0, %s65
    %s83 = sphi 0, %s83
    %s85 = sphi 0, %s83
    %s86 = sphi 0, %s85
    %s100 = sphi 0, %s86
    %s104 = sphi 0, %s104
    %s106 = sphi 0, %s104
    %s107 = sphi 0, %s106
    %s121 = sphi 0, %s107
    %s125 = sphi 0, %s125
    %s127 = sphi 0, %s125
    %s128 = sphi 0, %s127
    %s142 = sphi 0, %s128
    %s148 = sphi 0, %s150
    %s151 = sphi 0, %s148
    %s152 = sphi 0, %s151
    %s168 = sphi 0, %s152
  $region4: #{dense_gcn_forward.1} parent=0 // loop_header_branch
    %15 = sbr.rel (%p13) target = $region8
  $region5: #{dense_gcn_forward.1} parent=0 // loop_body
    %s17 = ssub.s32 %s12, 1
    %s18 = ssub.s32 %s12, 2
    %s19 = sadd.s32 %s12, 1
    %s21 = sadd.s32 %s20, 1
    %p24 = scmp.eq.s32.totalorder %s12, 1
    %p25 = scmp.ne.s32.totalorder %s20, %s22
    %p26 = scmp.eq.s32.totalorder %s12, 0
    %p27 = por %p25, %p26
    %p28 = scmp.ne.s32.totalorder %s20, %s22
    %p29 = scmp.eq.s32.totalorder %s17, 1
    %p30 = por %p28, %p29
    %p31 = scmp.ne.s32.totalorder %s22, %s23
    %p32 = scmp.eq.s32.totalorder %s17, 0
    %p33 = por %p31, %p32
    %p34 = scmp.ne.s32.totalorder %s22, %s23
    %p35 = scmp.eq.s32.totalorder %s18, 1
    %p36 = por %p34, %p35
    %p38 = scmp.ne.s32.totalorder %s23, %s37
    %p39 = scmp.eq.s32.totalorder %s18, 0
    %p40 = por %p38, %p39
    %s42 = sadd.s32 %s41, 1
    %p45 = scmp.eq.s32.totalorder %s12, 1
    %p46 = scmp.ne.s32.totalorder %s41, %s43
    %p47 = scmp.eq.s32.totalorder %s12, 0
    %p48 = por %p46, %p47
    %p49 = scmp.ne.s32.totalorder %s41, %s43
    %p50 = scmp.eq.s32.totalorder %s17, 1
    %p51 = por %p49, %p50
    %p52 = scmp.ne.s32.totalorder %s43, %s44
    %p53 = scmp.eq.s32.totalorder %s17, 0
    %p54 = por %p52, %p53
    %p55 = scmp.ne.s32.totalorder %s43, %s44
    %p56 = scmp.eq.s32.totalorder %s18, 1
    %p57 = por %p55, %p56
    %p59 = scmp.ne.s32.totalorder %s44, %s58
    %p60 = scmp.eq.s32.totalorder %s18, 0
    %p61 = por %p59, %p60
    %s63 = sadd.s32 %s62, 1
    %p66 = scmp.eq.s32.totalorder %s12, 1
    %p67 = scmp.ne.s32.totalorder %s62, %s64
    %p68 = scmp.eq.s32.totalorder %s12, 0
    %p69 = por %p67, %p68
    %p70 = scmp.ne.s32.totalorder %s62, %s64
    %p71 = scmp.eq.s32.totalorder %s17, 1
    %p72 = por %p70, %p71
    %p73 = scmp.ne.s32.totalorder %s64, %s65
    %p74 = scmp.eq.s32.totalorder %s17, 0
    %p75 = por %p73, %p74
    %p76 = scmp.ne.s32.totalorder %s64, %s65
    %p77 = scmp.eq.s32.totalorder %s18, 1
    %p78 = por %p76, %p77
    %p80 = scmp.ne.s32.totalorder %s65, %s79
    %p81 = scmp.eq.s32.totalorder %s18, 0
    %p82 = por %p80, %p81
    %s84 = sadd.s32 %s83, 1
    %p87 = scmp.eq.s32.totalorder %s12, 1
    %p88 = scmp.ne.s32.totalorder %s83, %s85
    %p89 = scmp.eq.s32.totalorder %s12, 0
    %p90 = por %p88, %p89
    %p91 = scmp.ne.s32.totalorder %s83, %s85
    %p92 = scmp.eq.s32.totalorder %s17, 1
    %p93 = por %p91, %p92
    %p94 = scmp.ne.s32.totalorder %s85, %s86
    %p95 = scmp.eq.s32.totalorder %s17, 0
    %p96 = por %p94, %p95
    %p97 = scmp.ne.s32.totalorder %s85, %s86
    %p98 = scmp.eq.s32.totalorder %s18, 1
    %p99 = por %p97, %p98
    %p101 = scmp.ne.s32.totalorder %s86, %s100
    %p102 = scmp.eq.s32.totalorder %s18, 0
    %p103 = por %p101, %p102
    %s105 = sadd.s32 %s104, 1
    %p108 = scmp.eq.s32.totalorder %s12, 1
    %p109 = scmp.ne.s32.totalorder %s104, %s106
    %p110 = scmp.eq.s32.totalorder %s12, 0
    %p111 = por %p109, %p110
    %p112 = scmp.ne.s32.totalorder %s104, %s106
    %p113 = scmp.eq.s32.totalorder %s17, 1
    %p114 = por %p112, %p113
    %p115 = scmp.ne.s32.totalorder %s106, %s107
    %p116 = scmp.eq.s32.totalorder %s17, 0
    %p117 = por %p115, %p116
    %p118 = scmp.ne.s32.totalorder %s106, %s107
    %p119 = scmp.eq.s32.totalorder %s18, 1
    %p120 = por %p118, %p119
    %p122 = scmp.ne.s32.totalorder %s107, %s121
    %p123 = scmp.eq.s32.totalorder %s18, 0
    %p124 = por %p122, %p123
    %s126 = sadd.s32 %s125, 1
    %p129 = scmp.eq.s32.totalorder %s12, 1
    %p130 = scmp.ne.s32.totalorder %s125, %s127
    %p131 = scmp.eq.s32.totalorder %s12, 0
    %p132 = por %p130, %p131
    %p133 = scmp.ne.s32.totalorder %s125, %s127
    %p134 = scmp.eq.s32.totalorder %s17, 1
    %p135 = por %p133, %p134
    %p136 = scmp.ne.s32.totalorder %s127, %s128
    %p137 = scmp.eq.s32.totalorder %s17, 0
    %p138 = por %p136, %p137
    %p139 = scmp.ne.s32.totalorder %s127, %s128
    %p140 = scmp.eq.s32.totalorder %s18, 1
    %p141 = por %p139, %p140
    %p143 = scmp.ne.s32.totalorder %s128, %s142
    %p144 = scmp.eq.s32.totalorder %s18, 0
    %p145 = por %p143, %p144
    %s146 = ssub.s32 %s12, %s19
    %p147 = scmp.eq.s32.totalorder %s146, 0
    %s149 = sadd.s32 %s148, 1
    %s150 = scalar_select %p147, %s148, %s149
    %p153 = pneg %p147
    %p154 = scmp.eq.s32.totalorder %s12, 1
    %p155 = por %p153, %p154
    %p156 = scmp.ne.s32.totalorder %s148, %s151
    %p157 = scmp.eq.s32.totalorder %s12, 0
    %p158 = por %p156, %p157
    %p159 = scmp.ne.s32.totalorder %s148, %s151
    %p160 = scmp.eq.s32.totalorder %s17, 1
    %p161 = por %p159, %p160
    %p162 = scmp.ne.s32.totalorder %s151, %s152
    %p163 = scmp.eq.s32.totalorder %s17, 0
    %p164 = por %p162, %p163
    %p165 = scmp.ne.s32.totalorder %s151, %s152
    %p166 = scmp.eq.s32.totalorder %s18, 1
    %p167 = por %p165, %p166
    %p169 = scmp.ne.s32.totalorder %s152, %s168
    %p170 = scmp.eq.s32.totalorder %s18, 0
    %p171 = por %p169, %p170
    %p172 = scmp.le.s32.totalorder 1, %s12
    %p173 = scmp.lt.s32.totalorder %s12, 3
    %p174 = pnand %p172, %p173
    %p175 = pneg %p174
    // Predicated region
    $region9: #{dense_gcn_forward.1} parent=5 // pred_check
      _
    $region10: #{dense_gcn_forward.1} parent=5 // pred_check_branch
      %177 = sbr.rel (%p174) target = $region12
    $region11: #{dense_gcn_forward.1} parent=5 // pred_region
      %s178 = ssub.s32 %s12, 1
      // Predicated region
      $region13: #{dense_gcn_forward.1} parent=11 // pred_check
        %p179 = pneg %p33
      $region14: #{dense_gcn_forward.1} parent=11 // pred_check_branch
        %181 = sbr.rel (%p179) target = $region16
      $region15: #{dense_gcn_forward.1} parent=11 // pred_region
        _
      $region16: #{dense_gcn_forward.1} parent=11 // pred_fallthru
        _
      // Predicated region
      $region17: #{dense_gcn_forward.1} parent=11 // pred_check
        %p182 = pneg %p54
      $region18: #{dense_gcn_forward.1} parent=11 // pred_check_branch
        %184 = sbr.rel (%p182) target = $region20
      $region19: #{dense_gcn_forward.1} parent=11 // pred_region
        _
      $region20: #{dense_gcn_forward.1} parent=11 // pred_fallthru
        _
      // Predicated region
      $region21: #{dense_gcn_forward.1} parent=11 // pred_check
        %p185 = pneg %p75
      $region22: #{dense_gcn_forward.1} parent=11 // pred_check_branch
        %187 = sbr.rel (%p185) target = $region24
      $region23: #{dense_gcn_forward.1} parent=11 // pred_region
        _
      $region24: #{dense_gcn_forward.1} parent=11 // pred_fallthru
        _
      // Predicated region
      $region25: #{dense_gcn_forward.1} parent=11 // pred_check
        %p188 = pneg %p96
      $region26: #{dense_gcn_forward.1} parent=11 // pred_check_branch
        %190 = sbr.rel (%p188) target = $region28
      $region27: #{dense_gcn_forward.1} parent=11 // pred_region
        _
      $region28: #{dense_gcn_forward.1} parent=11 // pred_fallthru
        _
      // Predicated region
      $region29: #{dense_gcn_forward.1} parent=11 // pred_check
        %p191 = pneg %p117
      $region30: #{dense_gcn_forward.1} parent=11 // pred_check_branch
        %193 = sbr.rel (%p191) target = $region32
      $region31: #{dense_gcn_forward.1} parent=11 // pred_region
        _
      $region32: #{dense_gcn_forward.1} parent=11 // pred_fallthru
        _
      // Predicated region
      $region33: #{dense_gcn_forward.1} parent=11 // pred_check
        %p194 = pneg %p138
      $region34: #{dense_gcn_forward.1} parent=11 // pred_check_branch
        %196 = sbr.rel (%p194) target = $region36
      $region35: #{dense_gcn_forward.1} parent=11 // pred_region
        _
      $region36: #{dense_gcn_forward.1} parent=11 // pred_fallthru
        _
    $region12: #{dense_gcn_forward.1} parent=5 // pred_fallthru
      _
    %p197 = scmp.lt.s32.totalorder %s12, 2
    // Predicated region
    $region37: #{dense_gcn_forward.1} parent=5 // pred_check
      %p198 = pneg %p197
    $region38: #{dense_gcn_forward.1} parent=5 // pred_check_branch
      %200 = sbr.rel (%p198) target = $region40
    $region39: #{dense_gcn_forward.1} parent=5 // pred_region
      _
    $region40: #{dense_gcn_forward.1} parent=5 // pred_fallthru
      _
    %p201 = scmp.le.s32.totalorder 1, %s12
    %p202 = scmp.lt.s32.totalorder %s12, 3
    %p203 = pnand %p201, %p202
    %p204 = pneg %p203
    // Predicated region
    $region41: #{dense_gcn_forward.1} parent=5 // pred_check
      _
    $region42: #{dense_gcn_forward.1} parent=5 // pred_check_branch
      %206 = sbr.rel (%p203) target = $region44
    $region43: #{dense_gcn_forward.1} parent=5 // pred_region
      %s207 = ssub.s32 %s12, 1
      %p208 = pneg %p33
      %p209 = pneg %p30
      %p210 = pneg %p54
      %p211 = pneg %p51
      %p212 = pneg %p75
      %p213 = pneg %p72
      %p214 = pneg %p96
      %p215 = pneg %p93
      %p216 = pneg %p117
      %p217 = pneg %p114
      %p218 = pneg %p138
      %p219 = pneg %p135
      %p220 = pneg %p164
      %p221 = pneg %p161
      %p222 = scmp.lt.s32.totalorder %s17, 1
      %s223 = scalar_select %p222, %s17, 1
      %s224 = smul.addr %s223, 8
      %s225 = scalar_lea.vmem %s6, %s224
      %p226 = scmp.lt.s32.totalorder %s17, 1
      %s227 = scalar_select %p226, %s17, 1
      %s228 = smul.addr %s227, 8
      %s229 = scalar_lea.vmem %s6, %s228
      %v230 = vld [vmem:[%s0] sm:$0xff]
      %v231 = vld [vmem:[%s0 + $0x8] sm:$0xff]
      %v232 = vlaneseq
      %v233 = vshrl.u32 %v232, 7
      %v234 = vlaneseq
      %v235 = vand.u32 %v234, 127
      %vm236 = vcmp.eq.s32.totalorder %v233, %v235
      %v237 = vsel %vm236, 1, 0
      %v238 = vcvt.s32.f32 %v237
      %vm239 = vcmask 64512
      %v240 = vsel %vm239, %v230, 0.0
      %v241 = vrot.slane %v240, 4
      %v242 = vadd.f32 %v240, %v241
      %v243 = vrot.slane %v242, 2
      %v244 = vadd.f32 %v242, %v243
      %v245 = vrot.slane %v244, 1
      %v246 = vadd.f32 %v244, %v245
      %v247 = vsel %vm239, %v231, 0.0
      %v248 = vrot.slane %v247, 4
      %v249 = vadd.f32 %v247, %v248
      %v250 = vrot.slane %v249, 2
      %v251 = vadd.f32 %v249, %v250
      %v252 = vrot.slane %v251, 1
      %v253 = vadd.f32 %v251, %v252
      %v254 = vadd.f32 %v246, 1.0
      %v255 = vadd.f32 %v253, 1.0
      %v256 = vmul.f32 %v238, %v254
      %v257 = vmul.f32 %v238, %v255
      %v258 = vsel %vm239, %v256, 0.0
      %259 = vadd.xlane.f32.xlu0 %v258
      %v260 = vpop.xlane.xlu0 %259
      %v261 = vsel %vm239, %v257, 0.0
      %262 = vadd.xlane.f32.xlu0 %v261
      %v263 = vpop.xlane.xlu0 %262
      %v264 = vadd.f32 %v260, 1e-06
      %v265 = vadd.f32 %v263, 1e-06
      %v266 = vrsqrt.pop %v264
      %v267 = vrsqrt.pop %v265
      %v268 = vmul.f32 %v230, %v238
      %v269 = vmul.f32 %v231, %v238
      %v270 = vsel %vm239, %v268, 0.0
      %271 = vadd.xlane.f32.xlu0 %v270
      %v272 = vpop.xlane.xlu0 %271
      %v273 = vsel %vm239, %v269, 0.0
      %274 = vadd.xlane.f32.xlu0 %v273
      %v275 = vpop.xlane.xlu0 %274
      %v276 = vadd.f32 %v272, 1.0
      %v277 = vadd.f32 %v275, 1.0
      %v278 = vmul.f32 %v276, %v266
      %v279 = vmul.f32 %v277, %v267
      %v280 = vstv %s17
      %vm281 = vcmp.eq.s32.totalorder %v280, 0
      %vm282 = vcmp.eq.s32.totalorder %v280, 1
      %v283 = vsel %vm281, %v266, 0.0
      %v284 = vsel %vm282, %v267, 0.0
      %v285 = vadd.f32 %v283, %v284
      %v286 = vmul.f32 %v278, %v285
      %v287 = vmul.f32 %v279, %v285
      %v288 = vld [vmem:[%s1] sm:$0xff]
      %v289 = vld [vmem:[%s1 + $0x8] sm:$0xff]
      %v290 = vld [vmem:[%s2] sm:$0xf]
      %vm291 = vcmask 31744
      %v293 = vsel %vm291, %v288, 0
      %v296 = vsel %vm291, %v289, 0
      %vm298 = vcmask 1043456
      %v300 = vsel %vm298, %v290, 0
      %302 = vmatprep.subr.mxu0 0.0
      %303 = vmatpush1.msra.mxu0 %v300
      %304 = vmatprep.subr.mxu0 0.0
      %305 = vmatpush1.msra.mxu0 0.0
      %306 = vmatprep.subr.mxu0 0.0
      %307 = vmatpush1.msra.mxu0 0.0
      %308 = vmatprep.subr.mxu0 0.0
      %309 = vmatpush1.msra.mxu0 0.0
      %310 = vmatprep.subr.mxu0 0.0
      %311 = vmatpush1.msra.mxu0 0.0
      %312 = vmatprep.subr.mxu0 0.0
      %313 = vmatpush1.msra.mxu0 0.0
      %314 = vmatprep.subr.mxu0 0.0
      %315 = vmatpush1.msra.mxu0 0.0
      %316 = vmatprep.subr.mxu0 0.0
      %317 = vmatpush1.msra.mxu0 0.0
      %318 = vmatprep.subr.mxu0 0.0
      %319 = vmatpush1.msra.mxu0 0.0
      %320 = vmatprep.subr.mxu0 0.0
      %321 = vmatpush1.msra.mxu0 0.0
      %322 = vmatprep.subr.mxu0 0.0
      %323 = vmatpush1.msra.mxu0 0.0
      %324 = vmatprep.subr.mxu0 0.0
      %325 = vmatpush1.msra.mxu0 0.0
      %326 = vmatprep.subr.mxu0 0.0
      %327 = vmatpush1.msra.mxu0 0.0
      %328 = vmatprep.subr.mxu0 0.0
      %329 = vmatpush1.msra.mxu0 0.0
      %330 = vmatprep.subr.mxu0 0.0
      %331 = vmatpush1.msra.mxu0 0.0
      %332 = vmatprep.subr.mxu0 0.0
      %333 = vmatpush1.msra.mxu0 0.0
      %334 = vmatprep.subr.mxu0 0.0
      %335 = vmatpush1.msra.mxu0 0.0
      %336 = vmatprep.subr.mxu0 0.0
      %337 = vmatpush1.msra.mxu0 0.0
      %338 = vmatprep.subr.mxu0 0.0
      %339 = vmatpush1.msra.mxu0 0.0
      %340 = vmatprep.subr.mxu0 0.0
      %341 = vmatpush1.msra.mxu0 0.0
      %342 = vmatprep.subr.mxu0 0.0
      %343 = vmatpush1.msra.mxu0 0.0
      %344 = vmatprep.subr.mxu0 0.0
      %345 = vmatpush1.msra.mxu0 0.0
      %346 = vmatprep.subr.mxu0 0.0
      %347 = vmatpush1.msra.mxu0 0.0
      %348 = vmatprep.subr.mxu0 0.0
      %349 = vmatpush1.msra.mxu0 0.0
      %350 = vmatprep.subr.mxu0 0.0
      %351 = vmatpush1.msra.mxu0 0.0
      %352 = vmatprep.subr.mxu0 0.0
      %353 = vmatpush1.msra.mxu0 0.0
      %354 = vmatprep.subr.mxu0 0.0
      %355 = vmatpush1.msra.mxu0 0.0
      %356 = vmatprep.subr.mxu0 0.0
      %357 = vmatpush1.msra.mxu0 0.0
      %358 = vmatprep.subr.mxu0 0.0
      %359 = vmatpush1.msra.mxu0 0.0
      %360 = vmatprep.subr.mxu0 0.0
      %361 = vmatpush1.msra.mxu0 0.0
      %362 = vmatprep.subr.mxu0 0.0
      %363 = vmatpush1.msra.mxu0 0.0
      %364 = vmatprep.subr.mxu0 0.0
      %365 = vmatpush1.msra.mxu0 0.0
      %366 = vmatprep.mubr.f32.mxu0 0.0
      %367 = vmatmul.mubr.f32.gmra.mrb[0].mxu0 %v293
      %v368 = vpop.f32.mrb[0].mxu0
      %v369 = vadd.f32 0.0, %v368
      %v370 = vpop.f32.mrb[0].mxu0
      %371 = vmatprep.mubr.f32.mxu0 0.0
      %372 = vmatmul.mubr.f32.gmra.mrb[0].mxu0 %v296
      %v373 = vpop.f32.mrb[0].mxu0
      %v374 = vadd.f32 0.0, %v373
      %v375 = vpop.f32.mrb[0].mxu0
      %376 = vdwg.mxu0
      %v377 = vmul.f32 %v286, %v369
      %v378 = vmul.f32 %v287, %v374
      %v379 = vld [vmem:[%s4] sm:$0x1]
      %v381 = vlaneseq
      %v382 = vshrl.u32 %v381, 7
      %v383 = vsub.s32 0, %v382
      %v384 = vrot.slane %v379, %v383
      %v386 = vadd.f32 %v377, %v384
      %v387 = vadd.f32 %v378, %v384
      %v388 = vmax.f32 %v386, 0.0
      %v389 = vmax.f32 %v387, 0.0
      %v390 = vld [vmem:[%s3] sm:$0xff]
      %v391 = vld [vmem:[%s3 + $0x8] sm:$0xff]
      %v392 = vld [vmem:[%s3 + $0x10] sm:$0xff]
      %v393 = vld [vmem:[%s3 + $0x18] sm:$0xff]
      %v394 = vld [vmem:[%s3 + $0x20] sm:$0xff]
      %v395 = vld [vmem:[%s3 + $0x28] sm:$0xff]
      %v396 = vld [vmem:[%s3 + $0x30] sm:$0xff]
      %v397 = vld [vmem:[%s3 + $0x38] sm:$0xff]
      %v398 = vld [vmem:[%s3 + $0x40] sm:$0xff]
      %v399 = vld [vmem:[%s3 + $0x48] sm:$0xff]
      %v400 = vld [vmem:[%s3 + $0x50] sm:$0xff]
      %v401 = vld [vmem:[%s3 + $0x58] sm:$0xff]
      %v402 = vld [vmem:[%s3 + $0x60] sm:$0xff]
      %v403 = vld [vmem:[%s3 + $0x68] sm:$0xff]
      %v404 = vld [vmem:[%s3 + $0x70] sm:$0xff]
      %v405 = vld [vmem:[%s3 + $0x78] sm:$0xff]
      %406 = vmatprep.subr.mxu0 0.0
      %407 = vmatpush1.msra.mxu0 %v390
      %408 = vmatprep.subr.mxu0 0.0
      %409 = vmatpush1.msra.mxu0 %v391
      %410 = vmatprep.subr.mxu0 0.0
      %411 = vmatpush1.msra.mxu0 %v392
      %412 = vmatprep.subr.mxu0 0.0
      %413 = vmatpush1.msra.mxu0 %v393
      %414 = vmatprep.subr.mxu0 0.0
      %415 = vmatpush1.msra.mxu0 %v394
      %416 = vmatprep.subr.mxu0 0.0
      %417 = vmatpush1.msra.mxu0 %v395
      %418 = vmatprep.subr.mxu0 0.0
      %419 = vmatpush1.msra.mxu0 %v396
      %420 = vmatprep.subr.mxu0 0.0
      %421 = vmatpush1.msra.mxu0 %v397
      %422 = vmatprep.subr.mxu0 0.0
      %423 = vmatpush1.msra.mxu0 %v398
      %424 = vmatprep.subr.mxu0 0.0
      %425 = vmatpush1.msra.mxu0 %v399
      %426 = vmatprep.subr.mxu0 0.0
      %427 = vmatpush1.msra.mxu0 %v400
      %428 = vmatprep.subr.mxu0 0.0
      %429 = vmatpush1.msra.mxu0 %v401
      %430 = vmatprep.subr.mxu0 0.0
      %431 = vmatpush1.msra.mxu0 %v402
      %432 = vmatprep.subr.mxu0 0.0
      %433 = vmatpush1.msra.mxu0 %v403
      %434 = vmatprep.subr.mxu0 0.0
      %435 = vmatpush1.msra.mxu0 %v404
      %436 = vmatprep.subr.mxu0 0.0
      %437 = vmatpush1.msra.mxu0 %v405
      %438 = vmatprep.subr.mxu0 0.0
      %439 = vmatpush1.msra.mxu0 0.0
      %440 = vmatprep.subr.mxu0 0.0
      %441 = vmatpush1.msra.mxu0 0.0
      %442 = vmatprep.subr.mxu0 0.0
      %443 = vmatpush1.msra.mxu0 0.0
      %444 = vmatprep.subr.mxu0 0.0
      %445 = vmatpush1.msra.mxu0 0.0
      %446 = vmatprep.subr.mxu0 0.0
      %447 = vmatpush1.msra.mxu0 0.0
      %448 = vmatprep.subr.mxu0 0.0
      %449 = vmatpush1.msra.mxu0 0.0
      %450 = vmatprep.subr.mxu0 0.0
      %451 = vmatpush1.msra.mxu0 0.0
      %452 = vmatprep.subr.mxu0 0.0
      %453 = vmatpush1.msra.mxu0 0.0
      %454 = vmatprep.subr.mxu0 0.0
      %455 = vmatpush1.msra.mxu0 0.0
      %456 = vmatprep.subr.mxu0 0.0
      %457 = vmatpush1.msra.mxu0 0.0
      %458 = vmatprep.subr.mxu0 0.0
      %459 = vmatpush1.msra.mxu0 0.0
      %460 = vmatprep.subr.mxu0 0.0
      %461 = vmatpush1.msra.mxu0 0.0
      %462 = vmatprep.subr.mxu0 0.0
      %463 = vmatpush1.msra.mxu0 0.0
      %464 = vmatprep.subr.mxu0 0.0
      %465 = vmatpush1.msra.mxu0 0.0
      %466 = vmatprep.subr.mxu0 0.0
      %467 = vmatpush1.msra.mxu0 0.0
      %468 = vmatprep.subr.mxu0 0.0
      %469 = vmatpush1.msra.mxu0 0.0
      %470 = vmatprep.mubr.f32.mxu0 0.0
      %471 = vmatmul.mubr.f32.gmra.mrb[0].mxu0 %v388
      %v472 = vpop.f32.mrb[0].mxu0
      %v473 = vadd.f32 0.0, %v472
      %v474 = vpop.f32.mrb[0].mxu0
      %475 = vmatprep.mubr.f32.mxu0 0.0
      %476 = vmatmul.mubr.f32.gmra.mrb[0].mxu0 %v389
      %v477 = vpop.f32.mrb[0].mxu0
      %v478 = vadd.f32 0.0, %v477
      %v479 = vpop.f32.mrb[0].mxu0
      %480 = vdwg.mxu0
      %v481 = vmul.f32 %v286, %v473
      %v482 = vmul.f32 %v287, %v478
      %v483 = vadd.f32 %v481, %v482
      %v484 = vrcp.pop 2.0
      %v485 = vmul.f32 %v483, %v484
      %v486 = vld [vmem:[%s5] sm:$0x1]
      %v488 = vlaneseq
      %v489 = vshrl.u32 %v488, 7
      %v490 = vsub.s32 0, %v489
      %v491 = vrot.slane %v486, %v490
      %v493 = vadd.f32 %v485, %v491
      %494 = vst [vmem:[%s229] sm:$0xff] %v493
      %p495 = scmp.lt.s32.totalorder %s17, 1
      %s496 = scalar_select %p495, %s17, 1
      %s497 = smul.addr %s496, 8
      %s498 = scalar_lea.vmem %s6, %s497
      // Predicated region
      $region45: #{dense_gcn_forward.1} parent=43 // pred_check
        %p499 = pneg %p161
      $region46: #{dense_gcn_forward.1} parent=43 // pred_check_branch
        %501 = sbr.rel (%p499) target = $region48
      $region47: #{dense_gcn_forward.1} parent=43 // pred_region
        _
      $region48: #{dense_gcn_forward.1} parent=43 // pred_fallthru
        _
    $region44: #{dense_gcn_forward.1} parent=5 // pred_fallthru
      _
    %p502 = scmp.le.s32.totalorder 2, %s12
    // Predicated region
    $region49: #{dense_gcn_forward.1} parent=5 // pred_check
      %p503 = pneg %p502
    $region50: #{dense_gcn_forward.1} parent=5 // pred_check_branch
      %505 = sbr.rel (%p503) target = $region52
    $region51: #{dense_gcn_forward.1} parent=5 // pred_region
      %s506 = ssub.s32 %s12, 2
      // Predicated region
      $region53: #{dense_gcn_forward.1} parent=51 // pred_check
        %p507 = pneg %p167
      $region54: #{dense_gcn_forward.1} parent=51 // pred_check_branch
        %509 = sbr.rel (%p507) target = $region56
      $region55: #{dense_gcn_forward.1} parent=51 // pred_region
        %p510 = scmp.lt.s32.totalorder %s18, 1
        %s511 = scalar_select %p510, %s18, 1
        %s512 = smul.addr %s511, 8
        %s513 = scalar_lea.vmem %s6, %s512
      $region56: #{dense_gcn_forward.1} parent=51 // pred_fallthru
        _
    $region52: #{dense_gcn_forward.1} parent=5 // pred_fallthru
      _
  $region6: #{dense_gcn_forward.1} parent=0 // loop_footer
    %s16 = sadd.s32 1, %s12
  $region7: #{dense_gcn_forward.1} parent=0 // loop_footer_branch
    %11 = sbr.rel target = $region3
  $region8: #{dense_gcn_forward.1} parent=0 // loop_exit
    _

</llo_original>
